<compile_context>
chip_gen: v6e
topology: v6e:2x2x1
jax: 0.10.0
libtpu: 0.0.40
codegen_flags: <defaults>
</compile_context>

<pallas_src>
import functools
import math

import jax
import jax.numpy as jnp
from jax.experimental import pallas as pl
from jax.experimental.pallas import tpu as pltpu


def _round_up(x, m):
    return ((x + m - 1) // m) * m


def _vmem_capacity_bytes():
    """Physical per-core VMEM; conservative fallback = 64 MiB (v7x)."""
    try:
        info = pltpu.get_tpu_info()
        for attr in ("vmem_capacity_bytes", "vmem_size_bytes", "vmem_bytes"):
            val = getattr(info, attr, None)
            if val:
                return int(val)
    except Exception:
        pass
    return 64 * 1024 * 1024


def _vmem_limit_bytes():
    """Scoped VMEM limit: above the per-generation defaults, below physical."""
    return min(int(_vmem_capacity_bytes() * 0.70), 100 * 1024 * 1024)


def _choose_tiles(n_rows, vocab, itemsize, row_tile=None, v_tile=None):
    """Pick (TN row tile, TV vocab tile, num_v vocab tiles).

    The double-buffered (TN, TV) log-prob stream is budgeted at ~20% of
    physical VMEM (leaving headroom for in-kernel temporaries under the 0.7x
    scoped limit); TN is additionally capped so the row grid has ~8+ steps
    (keeps the DMA pipeline full and lets megacore shard the row axis)."""
    budget = int(_vmem_capacity_bytes() * 0.20)

    # --- vocab (lane) tiling: keep the whole vocab per block unless that
    #     would force tiny row tiles (huge vocab, e.g. on v7x's 64 MiB VMEM).
    if v_tile is not None:
        tv = int(v_tile)
        if tv >= vocab:
            tv, num_v = vocab, 1
        else:
            assert tv % 128 == 0, "v_tile must be a multiple of 128"
            num_v = pl.cdiv(vocab, tv)
    else:
        if budget // (2 * vocab * itemsize) >= 128:
            tv, num_v = vocab, 1
        else:
            tv = (budget // (2 * 256 * itemsize)) // 128 * 128
            tv = max(512, min(tv, _round_up(vocab, 128)))
            num_v = pl.cdiv(vocab, tv)
            if num_v == 1:
                tv = vocab

    # --- row (sublane) tiling.
    if row_tile is not None:
        tn = max(8, (int(row_tile) // 8) * 8)
    else:
        tn = budget // (2 * tv * itemsize)
        tn = max(16, min(int(tn), 2048))
        # >= ~8 row-grid steps (floor of one 16-row tile for tiny inputs).
        tn = min(tn, max(16, _round_up(pl.cdiv(n_rows, 8), 16)))
        tn = max(16, (tn // 16) * 16)
    return tn, tv, num_v


def _label_smoothing_kernel(target_ref, w_ref, x_ref, out_ref,
                            acc_smooth, acc_tgt, *,
                            vocab, n_ignore, ignore_indices,
                            confidence, c_log_c, smoothing_value, s_log_s,
                            mask_tail):
    # target_ref: (TN, 1) int32           -- same block for every vocab step
    # w_ref:      (1, TV) smoothed prior  -- s at keep cols, 0 at ignore / pad
    # x_ref:      (TN, TV) log-probs      -- input dtype (f32 or bf16)
    # out_ref:    (TN, 1) f32             -- resident across the vocab axis
    # acc_*:      (TN, 1) f32 scratch accumulators
    vj = pl.program_id(1)

    @pl.when(vj == 0)
    def _init():
        acc_smooth[...] = jnp.zeros_like(acc_smooth)
        acc_tgt[...] = jnp.zeros_like(acc_tgt)

    x = x_ref[...]                        # stays in input dtype
    w = w_ref[...]
    tgt = target_ref[...]                 # (TN, 1) int32
    tv = x.shape[-1]

    # Global vocab index of every lane in this tile.
    lane = jax.lax.broadcasted_iota(jnp.int32, (1, tv), 1) + vj * tv

    # x[row, target[row]], accumulated across vocab tiles (select + f32 sum).
    is_target = lane == tgt               # (TN, TV)
    acc_tgt[...] += jnp.sum(jnp.where(is_target, x, 0.0), axis=-1,
                            keepdims=True, dtype=jnp.float32)

    # Smoothed-prior cross term sum_v w_v * x_v.  Garbage lanes of a ragged
    # last vocab tile must be masked before the multiply (NaN * 0 != 0);
    # `mask_tail` is a compile-time flag so the common aligned case pays zero.
    xs = jnp.where(lane < vocab, x, 0.0) if mask_tail else x
    acc_smooth[...] += jnp.sum(xs * w, axis=-1, keepdims=True,
                               dtype=jnp.float32)

    @pl.when(vj == pl.num_programs(1) - 1)
    def _finalize():
        # in_mask = 1.0 iff the target is NOT an ignore column (i.e. the
        # smoothed prior already gave the target column weight s).  scatter_
        # overwrite semantics: the target column ends up at `confidence`
        # either way -- matching the provided PyTorch module, which does not
        # zero whole rows whose target is an ignore index.
        if ignore_indices:
            hit = tgt == ignore_indices[0]
            for idx in ignore_indices[1:]:
                hit = jnp.logical_or(hit, tgt == idx)
            in_mask = 1.0 - hit.astype(jnp.float32)
        else:
            in_mask = jnp.ones(tgt.shape, dtype=jnp.float32)

        # sum_v t*log(t): confidence at the target plus s at the remaining
        # (V - n_ignore - in_mask) columns; all logs are host constants.
        entropy = c_log_c + s_log_s * (float(vocab - n_ignore) - in_mask)
        # sum_v t*x: the smoothed pass weighted the target column by
        # s*in_mask; fix it up to `confidence`.
        cross = acc_smooth[...] + (confidence
                                   - smoothing_value * in_mask) * acc_tgt[...]
        out_ref[...] = entropy - cross


class LabelSmoothingPallas:
    """JAX/Pallas equivalent of the PyTorch LabelSmoothing module."""

    def __init__(self, smoothing, tgt_vocab_size, ignore_indices=None,
                 row_tile=None, v_tile=None):
        if ignore_indices is None:
            ignore_indices = []
        self.tgt_vocab_size = int(tgt_vocab_size)
        self.ignore_indices = tuple(int(i) for i in ignore_indices)
        self.confidence = 1.0 - float(smoothing)
        self.smoothing_value = float(smoothing) / float(
            tgt_vocab_size - 1 - len(self.ignore_indices))
        # Host-side constants (t == 0 entries contribute exactly 0).
        self._c_log_c = (self.confidence * math.log(self.confidence)
                         if self.confidence > 0.0 else 0.0)
        self._s_log_s = (self.smoothing_value * math.log(self.smoothing_value)
                         if self.smoothing_value > 0.0 else 0.0)
        self._row_tile = row_tile
        self._v_tile = v_tile
        self._vmem_limit = _vmem_limit_bytes()

        # Smoothed prior row (the torch `one_hot` buffer): s everywhere,
        # 0 at ignore columns.  Also streamed to the kernel as the resident
        # weight row (no per-step rebuild inside the kernel).
        one_hot = jnp.full((self.tgt_vocab_size,), self.smoothing_value,
                           dtype=jnp.float32)
        for idx in self.ignore_indices:
            one_hot = one_hot.at[idx].set(0.0)
        self.one_hot = one_hot.reshape(1, self.tgt_vocab_size)

    def __call__(self, model_prob, target):
        lead_shape = model_prob.shape[:-1]
        V = model_prob.shape[-1]
        assert V == self.tgt_vocab_size

        mp = model_prob.reshape(-1, V)                # dtype preserved
        tg = target.reshape(-1, 1).astype(jnp.int32)
        N = mp.shape[0]

        TN, TV, num_v = _choose_tiles(N, V, mp.dtype.itemsize,
                                      self._row_tile, self._v_tile)
        num_row_tiles = pl.cdiv(N, TN)
        Np = num_row_tiles * TN
        Vp = num_v * TV

        # Only the tiny target vector / weight row get padded; the (N, V)
        # log-prob tensor is streamed as-is with ragged edge tiles (garbage
        # tail rows are sliced off, garbage tail lanes are masked in-kernel).
        if Np != N:
            tg = jnp.pad(tg, ((0, Np - N), (0, 0)))
        w = self.one_hot
        if Vp != V:
            w = jnp.pad(w, ((0, 0), (0, Vp - V)))
        w = w.astype(mp.dtype)

        kernel = functools.partial(
            _label_smoothing_kernel,
            vocab=V, n_ignore=len(self.ignore_indices),
            ignore_indices=self.ignore_indices,
            confidence=self.confidence, c_log_c=self._c_log_c,
            smoothing_value=self.smoothing_value, s_log_s=self._s_log_s,
            mask_tail=(Vp != V))

        out = pl.pallas_call(
            kernel,
            out_shape=jax.ShapeDtypeStruct((Np, 1), jnp.float32),
            grid_spec=pltpu.PrefetchScalarGridSpec(
                num_scalar_prefetch=0,
                grid=(num_row_tiles, num_v),          # vocab (reduce) axis last
                in_specs=[
                    pl.BlockSpec((TN, 1), lambda i, j: (i, 0)),   # targets
                    pl.BlockSpec((1, TV), lambda i, j: (0, j)),   # prior row
                    pl.BlockSpec((TN, TV), lambda i, j: (i, j)),  # log-probs
                ],
                # (TN, 1) output: <= 1/V of total HBM traffic, contiguous
                # writeback, and no sublane->lane relayout of the reduction.
                out_specs=pl.BlockSpec((TN, 1), lambda i, j: (i, 0)),
                scratch_shapes=[pltpu.VMEM((TN, 1), jnp.float32),
                                pltpu.VMEM((TN, 1), jnp.float32)],
            ),
            compiler_params=pltpu.CompilerParams(
                dimension_semantics=("parallel", "arbitrary"),
                vmem_limit_bytes=self._vmem_limit),
        )(tg, w, mp)

        return out[:N, 0].reshape(lead_shape)


def _reference(one_hot, confidence, model_prob, target):
    """Pure-JAX reference matching the PyTorch module's semantics."""
    V = model_prob.shape[-1]
    true_dist = jnp.broadcast_to(one_hot[0], model_prob.shape)
    onehot_tgt = jax.nn.one_hot(target, V, dtype=bool)
    true_dist = jnp.where(onehot_tgt, confidence, true_dist)
    safe_t = jnp.where(true_dist > 0, true_dist, 1.0)
    contrib = jnp.where(true_dist > 0,
                        true_dist * (jnp.log(safe_t) - model_prob), 0.0)
    return contrib.sum(-1)


if __name__ == "__main__":
    key = jax.random.PRNGKey(0)
    k1, k2, k3, k4, k5, k6 = jax.random.split(key, 6)

    # Test 1: small f32 case, single vocab tile, default tiling.
    B, S, V = 2, 8, 128
    logits = jax.random.normal(k1, (B, S, V), dtype=jnp.float32)
    model_prob = jax.nn.log_softmax(logits, axis=-1)     # log-probs (KLDiv input)
    target = jax.random.randint(k2, (B, S), 0, V, dtype=jnp.int32)

    mod = LabelSmoothingPallas(smoothing=0.1, tgt_vocab_size=V,
                               ignore_indices=[0])
    out = jax.block_until_ready(mod(model_prob, target))
    ref = _reference(mod.one_hot, mod.confidence, model_prob, target)
    assert out.shape == (B, S)
    assert jnp.allclose(out, ref, atol=1e-4, rtol=1e-4), (out, ref)

    # Test 2: forces the vocab-tiled accumulator path with ragged row AND
    # ragged vocab tiles (N=200 rows, TN=64; V=320, TV=128 -> Vp=384, tail
    # masking), plus ignore indices that land in different vocab tiles.
    B2, S2, V2 = 2, 100, 320
    logits2 = jax.random.normal(k3, (B2, S2, V2), dtype=jnp.float32)
    model_prob2 = jax.nn.log_softmax(logits2, axis=-1)
    target2 = jax.random.randint(k4, (B2, S2), 0, V2, dtype=jnp.int32)

    mod2 = LabelSmoothingPallas(smoothing=0.1, tgt_vocab_size=V2,
                                ignore_indices=[0, 200],
                                row_tile=64, v_tile=128)
    out2 = jax.block_until_ready(mod2(model_prob2, target2))
    ref2 = _reference(mod2.one_hot, mod2.confidence, model_prob2, target2)
    assert out2.shape == (B2, S2)
    assert jnp.allclose(out2, ref2, atol=1e-4, rtol=1e-4), (out2, ref2)

    # Test 3: bf16 log-probs (elementwise stage stays bf16, f32 accumulation).
    B3, S3, V3 = 2, 50, 256
    logits3 = jax.random.normal(k5, (B3, S3, V3), dtype=jnp.float32)
    model_prob3 = jax.nn.log_softmax(logits3, axis=-1).astype(jnp.bfloat16)
    target3 = jax.random.randint(k6, (B3, S3), 0, V3, dtype=jnp.int32)

    mod3 = LabelSmoothingPallas(smoothing=0.1, tgt_vocab_size=V3,
                                ignore_indices=[1])
    out3 = jax.block_until_ready(mod3(model_prob3, target3))
    ref3 = _reference(mod3.one_hot, mod3.confidence,
                      model_prob3.astype(jnp.float32), target3)
    assert out3.shape == (B3, S3)
    assert jnp.allclose(out3, ref3, atol=5e-2, rtol=2e-2), (out3, ref3)

    print("KERNEL_OK")
</pallas_src>

<mosaic_0001>
module attributes {stable_mosaic.version = 11 : i64} {
  func.func @_label_smoothing_kernel(%arg0: i32, %arg1: i32, %arg2: memref<16x1xi32, #tpu.memory_space<vmem>>, %arg3: memref<1x128xf32, #tpu.memory_space<vmem>>, %arg4: memref<16x128xf32, #tpu.memory_space<vmem>>, %arg5: memref<16x1xf32, #tpu.memory_space<vmem>>, %arg6: memref<16x1xf32, #tpu.memory_space<vmem>>, %arg7: memref<16x1xf32, #tpu.memory_space<vmem>>) attributes {dimension_semantics = [#tpu.dimension_semantics<parallel>, #tpu.dimension_semantics<arbitrary>], iteration_bounds = array<i64: 1, 1>, scalar_prefetch = 0 : i64, scratch_operands = 2 : i64, tpu.core_type = #tpu.core_type<tc>, window_params = [{transform_indices = @transform_0, window_bounds = array<i64: 16, 1>}, {transform_indices = @transform_1, window_bounds = array<i64: 1, 128>}, {transform_indices = @transform_2, window_bounds = array<i64: 16, 128>}, {transform_indices = @transform_3, window_bounds = array<i64: 16, 1>}]} {
    %c0_i32 = arith.constant 0 : i32
    %0 = arith.cmpi eq, %arg1, %c0_i32 : i32
    %1 = arith.extui %0 : i1 to i32
    %c0_i32_0 = arith.constant 0 : i32
    %2 = arith.cmpi ne, %1, %c0_i32_0 : i32
    scf.if %2 {
      %cst_18 = arith.constant 0.000000e+00 : f32
      %30 = vector.broadcast %cst_18 : f32 to vector<16x1xf32>
      %c0_19 = arith.constant 0 : index
      %c0_20 = arith.constant 0 : index
      %31 = vector.load %arg6[%c0_19, %c0_20] : memref<16x1xf32, #tpu.memory_space<vmem>>, vector<16x1xf32>
      tpu.vector_store %arg6[%c0_19, %c0_20], %30 {strides = array<i32>} : memref<16x1xf32, #tpu.memory_space<vmem>>, vector<16x1xf32>,
      %cst_21 = arith.constant 0.000000e+00 : f32
      %32 = vector.broadcast %cst_21 : f32 to vector<16x1xf32>
      %c0_22 = arith.constant 0 : index
      %c0_23 = arith.constant 0 : index
      %33 = vector.load %arg7[%c0_22, %c0_23] : memref<16x1xf32, #tpu.memory_space<vmem>>, vector<16x1xf32>
      tpu.vector_store %arg7[%c0_22, %c0_23], %32 {strides = array<i32>} : memref<16x1xf32, #tpu.memory_space<vmem>>, vector<16x1xf32>,
    } else {
    }
    %c0 = arith.constant 0 : index
    %c0_1 = arith.constant 0 : index
    %3 = vector.load %arg4[%c0, %c0_1] : memref<16x128xf32, #tpu.memory_space<vmem>>, vector<16x128xf32>
    %c0_2 = arith.constant 0 : index
    %c0_3 = arith.constant 0 : index
    %4 = vector.load %arg3[%c0_2, %c0_3] : memref<1x128xf32, #tpu.memory_space<vmem>>, vector<1x128xf32>
    %c0_4 = arith.constant 0 : index
    %c0_5 = arith.constant 0 : index
    %5 = vector.load %arg2[%c0_4, %c0_5] : memref<16x1xi32, #tpu.memory_space<vmem>>, vector<16x1xi32>
    %6 = tpu.iota {dimensions = array<i32: 1>} : vector<1x128xi32>
    %c128_i32 = arith.constant 128 : i32
    %7 = arith.muli %arg1, %c128_i32 : i32
    %8 = vector.broadcast %7 : i32 to vector<1x128xi32>
    %9 = arith.addi %6, %8 : vector<1x128xi32>
    %10 = vector.broadcast %9 : vector<1x128xi32> to vector<16x128xi32>
    %11 = vector.broadcast %5 : vector<16x1xi32> to vector<16x128xi32>
    %12 = arith.cmpi eq, %10, %11 : vector<16x128xi32>
    %c0_6 = arith.constant 0 : index
    %c0_7 = arith.constant 0 : index
    %13 = vector.load %arg7[%c0_6, %c0_7] : memref<16x1xf32, #tpu.memory_space<vmem>>, vector<16x1xf32>
    %cst = arith.constant 0.000000e+00 : f32
    %14 = vector.broadcast %cst : f32 to vector<16x128xf32>
    %15 = arith.select %12, %3, %14 : vector<16x128xi1>, vector<16x128xf32>
    %cst_8 = arith.constant dense<0.000000e+00> : vector<16xf32>
    %16 = vector.multi_reduction <add>, %15, %cst_8 [1] : vector<16x128xf32> to vector<16xf32>
    %17 = vector.shape_cast %16 : vector<16xf32> to vector<16x1xf32>
    %18 = arith.addf %13, %17 : vector<16x1xf32>
    %c0_9 = arith.constant 0 : index
    %c0_10 = arith.constant 0 : index
    %19 = vector.load %arg7[%c0_9, %c0_10] : memref<16x1xf32, #tpu.memory_space<vmem>>, vector<16x1xf32>
    tpu.vector_store %arg7[%c0_9, %c0_10], %18 {strides = array<i32>} : memref<16x1xf32, #tpu.memory_space<vmem>>, vector<16x1xf32>,
    %c0_11 = arith.constant 0 : index
    %c0_12 = arith.constant 0 : index
    %20 = vector.load %arg6[%c0_11, %c0_12] : memref<16x1xf32, #tpu.memory_space<vmem>>, vector<16x1xf32>
    %21 = vector.broadcast %4 : vector<1x128xf32> to vector<16x128xf32>
    %22 = arith.mulf %3, %21 : vector<16x128xf32>
    %cst_13 = arith.constant dense<0.000000e+00> : vector<16xf32>
    %23 = vector.multi_reduction <add>, %22, %cst_13 [1] : vector<16x128xf32> to vector<16xf32>
    %24 = vector.shape_cast %23 : vector<16xf32> to vector<16x1xf32>
    %25 = arith.addf %20, %24 : vector<16x1xf32>
    %c0_14 = arith.constant 0 : index
    %c0_15 = arith.constant 0 : index
    %26 = vector.load %arg6[%c0_14, %c0_15] : memref<16x1xf32, #tpu.memory_space<vmem>>, vector<16x1xf32>
    tpu.vector_store %arg6[%c0_14, %c0_15], %25 {strides = array<i32>} : memref<16x1xf32, #tpu.memory_space<vmem>>, vector<16x1xf32>,
    %c0_i32_16 = arith.constant 0 : i32
    %27 = arith.cmpi eq, %arg1, %c0_i32_16 : i32
    %28 = arith.extui %27 : i1 to i32
    %c0_i32_17 = arith.constant 0 : i32
    %29 = arith.cmpi ne, %28, %c0_i32_17 : i32
    scf.if %29 {
      %c0_i32_18 = arith.constant 0 : i32
      %30 = vector.broadcast %c0_i32_18 : i32 to vector<16x1xi32>
      %31 = arith.cmpi eq, %5, %30 : vector<16x1xi32>
      %32 = arith.extui %31 : vector<16x1xi1> to vector<16x1xi32>
      %33 = arith.sitofp %32 : vector<16x1xi32> to vector<16x1xf32>
      %cst_19 = arith.constant 1.000000e+00 : f32
      %34 = vector.broadcast %cst_19 : f32 to vector<16x1xf32>
      %35 = arith.subf %34, %33 : vector<16x1xf32>
      %cst_20 = arith.constant 1.270000e+02 : f32
      %36 = vector.broadcast %cst_20 : f32 to vector<16x1xf32>
      %37 = arith.subf %36, %35 : vector<16x1xf32>
      %cst_21 = arith.constant -0.00566576747 : f32
      %38 = vector.broadcast %cst_21 : f32 to vector<16x1xf32>
      %39 = arith.mulf %38, %37 : vector<16x1xf32>
      %cst_22 = arith.constant -0.0948244631 : f32
      %40 = vector.broadcast %cst_22 : f32 to vector<16x1xf32>
      %41 = arith.addf %40, %39 : vector<16x1xf32>
      %c0_23 = arith.constant 0 : index
      %c0_24 = arith.constant 0 : index
      %42 = vector.load %arg6[%c0_23, %c0_24] : memref<16x1xf32, #tpu.memory_space<vmem>>, vector<16x1xf32>
      %cst_25 = arith.constant 7.93650805E-4 : f32
      %43 = vector.broadcast %cst_25 : f32 to vector<16x1xf32>
      %44 = arith.mulf %43, %35 : vector<16x1xf32>
      %cst_26 = arith.constant 0.899999976 : f32
      %45 = vector.broadcast %cst_26 : f32 to vector<16x1xf32>
      %46 = arith.subf %45, %44 : vector<16x1xf32>
      %c0_27 = arith.constant 0 : index
      %c0_28 = arith.constant 0 : index
      %47 = vector.load %arg7[%c0_27, %c0_28] : memref<16x1xf32, #tpu.memory_space<vmem>>, vector<16x1xf32>
      %48 = arith.mulf %46, %47 : vector<16x1xf32>
      %49 = arith.addf %42, %48 : vector<16x1xf32>
      %50 = arith.subf %41, %49 : vector<16x1xf32>
      %c0_29 = arith.constant 0 : index
      %c0_30 = arith.constant 0 : index
      %51 = vector.load %arg5[%c0_29, %c0_30] : memref<16x1xf32, #tpu.memory_space<vmem>>, vector<16x1xf32>
      tpu.vector_store %arg5[%c0_29, %c0_30], %50 {strides = array<i32>} : memref<16x1xf32, #tpu.memory_space<vmem>>, vector<16x1xf32>,
    } else {
    }
    return
  }
  func.func @transform_0(%arg0: i32, %arg1: i32) -> (i32, i32) {
    %c0_i32 = arith.constant 0 : i32
    %c0_i32_0 = arith.constant 0 : i32
    return %arg0, %c0_i32 : i32, i32
  }
  func.func @transform_1(%arg0: i32, %arg1: i32) -> (i32, i32) {
    %c0_i32 = arith.constant 0 : i32
    %c0_i32_0 = arith.constant 0 : i32
    return %c0_i32, %arg1 : i32, i32
  }
  func.func @transform_2(%arg0: i32, %arg1: i32) -> (i32, i32) {
    %c0_i32 = arith.constant 0 : i32
    return %arg0, %arg1 : i32, i32
  }
  func.func @transform_3(%arg0: i32, %arg1: i32) -> (i32, i32) {
    %c0_i32 = arith.constant 0 : i32
    %c0_i32_0 = arith.constant 0 : i32
    return %arg0, %c0_i32 : i32, i32
  }
}

</mosaic_0001>

<llo_original>
// kernel: tpu_custom_call.1
$region0: #{tpu_custom_call.1}
  #allocation0 [shape = 'u32[]', space=smem, size = 0x4, offset = 0x4, fixed_abs, tag = 'smem constant byte address 0x4 - core index']
  #allocation1 [shape = 'u32[144,128]{1,0:T(1,128)}', space=vmem, size = 0x12000, scoped, tag = 'internal scratch']
  #allocation2 [shape = 'f32[16,1]{1,0:T(8,128)}', space=vmem, size = 0x2000, scoped, tag = 'scratch operand']
  #allocation3 [shape = 'f32[16,1]{1,0:T(8,128)}', space=vmem, size = 0x2000, scoped, tag = 'scratch operand']
  %s0 = inlined_call_operand.vmem [shape: s32[16,1], index: 0, kind: input, shape index: {}]
  %s1 = inlined_call_operand.vmem [shape: f32[1,128], index: 1, kind: input, shape index: {}]
  %s2 = inlined_call_operand.vmem [shape: f32[16,128], index: 2, kind: input, shape index: {}]
  %s3 = inlined_call_operand.vmem [shape: f32[16,1], index: 3, kind: output, shape index: {}]
  %s4 = sld [smem:[#allocation0]]
  $region30: #{tpu_custom_call.1} parent=0
    _
  %s6 = ssub.s32 1, %s4
  %s7 = scalar_select 0, %s6, %s4
  // Predicated region
  $region2: #{tpu_custom_call.1} parent=0 // pred_check
    _
  $region3: #{tpu_custom_call.1} parent=0 // pred_check_branch
    %9 = sbr.rel (0) target = $region5
  $region4: #{tpu_custom_call.1} parent=0 // pred_region
    _
  $region5: #{tpu_custom_call.1} parent=0 // pred_fallthru
    _
  // Predicated region
  $region6: #{tpu_custom_call.1} parent=0 // pred_check
    _
  $region7: #{tpu_custom_call.1} parent=0 // pred_check_branch
    %11 = sbr.rel (0) target = $region9
  $region8: #{tpu_custom_call.1} parent=0 // pred_region
    _
  $region9: #{tpu_custom_call.1} parent=0 // pred_fallthru
    _
  // Predicated region
  $region10: #{tpu_custom_call.1} parent=0 // pred_check
    _
  $region11: #{tpu_custom_call.1} parent=0 // pred_check_branch
    %13 = sbr.rel (0) target = $region13
  $region12: #{tpu_custom_call.1} parent=0 // pred_region
    _
  $region13: #{tpu_custom_call.1} parent=0 // pred_fallthru
    _
  %p14 = scmp.eq.s32.totalorder 0, 0
  // Predicated region
  $region14: #{tpu_custom_call.1} parent=0 // pred_check
    %p15 = pneg %p14
  $region15: #{tpu_custom_call.1} parent=0 // pred_check_branch
    %17 = sbr.rel (%p15) target = $region17
  $region16: #{tpu_custom_call.1} parent=0 // pred_region
    %vm18 = vcmask 7168
    %19 = vst.msk [vmem:[#allocation2] sm:$0xff] %vm18, 0.0
    %20 = vst.msk [vmem:[#allocation2 + $0x8] sm:$0xff] %vm18, 0.0
    %21 = vst.msk [vmem:[#allocation3] sm:$0xff] %vm18, 0.0
    %22 = vst.msk [vmem:[#allocation3 + $0x8] sm:$0xff] %vm18, 0.0
  $region17: #{tpu_custom_call.1} parent=0 // pred_fallthru
    _
  %v23 = vld [vmem:[%s2] sm:$0xff]
  %v24 = vld [vmem:[%s2 + $0x8] sm:$0xff]
  %v25 = vld [vmem:[%s1] sm:$0x1]
  %v26 = vld [vmem:[%s0] sm:$0xff]
  %v27 = vld [vmem:[%s0 + $0x8] sm:$0xff]
  %v28 = vlaneseq
  %v29 = vand.u32 %v28, 127
  %s30 = smul.u32 0, 128
  %v31 = vstv %s30
  %v32 = vadd.s32 %v29, %v31
  %33 = vset.pattern.permute.xlu0 0
  %34 = vperm.xlu0 %33, %v26
  %v35 = vpop.permute.xlu0 %34
  %36 = vset.pattern.permute.xlu0 0
  %37 = vperm.xlu0 %36, %v27
  %v38 = vpop.permute.xlu0 %37
  %vm39 = vcmp.eq.s32.totalorder %v32, %v35
  %vm40 = vcmp.eq.s32.totalorder %v32, %v38
  %v41 = vld [vmem:[#allocation3] sm:$0xff]
  %v42 = vld [vmem:[#allocation3 + $0x8] sm:$0xff]
  %v43 = vsel %vm39, %v23, 0.0
  %v44 = vsel %vm40, %v24, 0.0
  %45 = vadd.xlane.f32.xlu0 %v43
  %v46 = vpop.xlane.xlu0 %45
  %47 = vadd.xlane.f32.xlu0 %v44
  %v48 = vpop.xlane.xlu0 %47
  %v49 = vadd.f32 %v41, %v46
  %v50 = vadd.f32 %v42, %v48
  %vm51 = vcmask 7168
  %52 = vst.msk [vmem:[#allocation3] sm:$0xff] %vm51, %v49
  %53 = vst.msk [vmem:[#allocation3 + $0x8] sm:$0xff] %vm51, %v50
  %v54 = vld [vmem:[#allocation2] sm:$0xff]
  %v55 = vld [vmem:[#allocation2 + $0x8] sm:$0xff]
  %v57 = vlaneseq
  %v58 = vshrl.u32 %v57, 7
  %v59 = vsub.s32 0, %v58
  %v60 = vrot.slane %v25, %v59
  %v62 = vmul.f32 %v23, %v60
  %v63 = vmul.f32 %v24, %v60
  %64 = vadd.xlane.f32.xlu0 %v62
  %v65 = vpop.xlane.xlu0 %64
  %66 = vadd.xlane.f32.xlu0 %v63
  %v67 = vpop.xlane.xlu0 %66
  %v68 = vadd.f32 %v54, %v65
  %v69 = vadd.f32 %v55, %v67
  %70 = vst.msk [vmem:[#allocation2] sm:$0xff] %vm51, %v68
  %71 = vst.msk [vmem:[#allocation2 + $0x8] sm:$0xff] %vm51, %v69
  // Predicated region
  $region18: #{tpu_custom_call.1} parent=0 // pred_check
    %p72 = pneg %p14
  $region19: #{tpu_custom_call.1} parent=0 // pred_check_branch
    %74 = sbr.rel (%p72) target = $region21
  $region20: #{tpu_custom_call.1} parent=0 // pred_region
    %vm75 = vcmp.eq.s32.totalorder %v26, 0
    %vm76 = vcmp.eq.s32.totalorder %v27, 0
    %v77 = vsel %vm75, 1, 0
    %v78 = vsel %vm76, 1, 0
    %v79 = vcvt.s32.f32 %v77
    %v80 = vcvt.s32.f32 %v78
    %v81 = vsub.f32 1.0, %v79
    %v82 = vsub.f32 1.0, %v80
    %v83 = vsub.f32 127.0, %v81
    %v84 = vsub.f32 127.0, %v82
    %v85 = vmul.f32 %v83, -0.0056657675
    %v86 = vmul.f32 %v84, -0.0056657675
    %v87 = vadd.f32 %v85, -0.09482446
    %v88 = vadd.f32 %v86, -0.09482446
    %v89 = vld [vmem:[#allocation2] sm:$0xff]
    %v90 = vld [vmem:[#allocation2 + $0x8] sm:$0xff]
    %v91 = vmul.f32 %v81, 0.0007936508
    %v92 = vmul.f32 %v82, 0.0007936508
    %v93 = vsub.f32 0.9, %v91
    %v94 = vsub.f32 0.9, %v92
    %v95 = vld [vmem:[#allocation3] sm:$0xff]
    %v96 = vld [vmem:[#allocation3 + $0x8] sm:$0xff]
    %v97 = vmul.f32 %v93, %v95
    %v98 = vmul.f32 %v94, %v96
    %v99 = vadd.f32 %v89, %v97
    %v100 = vadd.f32 %v90, %v98
    %v101 = vsub.f32 %v87, %v99
    %v102 = vsub.f32 %v88, %v100
    %103 = vst.msk [vmem:[%s3] sm:$0xff] %vm51, %v101
    %104 = vst.msk [vmem:[%s3 + $0x8] sm:$0xff] %vm51, %v102
  $region21: #{tpu_custom_call.1} parent=0 // pred_fallthru
    _
  // Predicated region
  $region22: #{tpu_custom_call.1} parent=0 // pred_check
    _
  $region23: #{tpu_custom_call.1} parent=0 // pred_check_branch
    %106 = sbr.rel (0) target = $region25
  $region24: #{tpu_custom_call.1} parent=0 // pred_region
    _
  $region25: #{tpu_custom_call.1} parent=0 // pred_fallthru
    _
  // Predicated region
  $region26: #{tpu_custom_call.1} parent=0 // pred_check
    _
  $region27: #{tpu_custom_call.1} parent=0 // pred_check_branch
    %108 = sbr.rel (0) target = $region29
  $region28: #{tpu_custom_call.1} parent=0 // pred_region
    _
  $region29: #{tpu_custom_call.1} parent=0 // pred_fallthru
    _

</llo_original>
